<compile_context>
chip_gen: v5e
topology: v5e:2x2
jax: 0.10.0
libtpu: 0.0.40
codegen_flags: <defaults>
</compile_context>

<pallas_src>
import itertools
from functools import partial

import numpy as np
import jax
import jax.numpy as jnp
from jax.experimental import pallas as pl
from jax.experimental.pallas import tpu as pltpu

_PAD_LOGIT = -30.0   # softplus(-30) ~ 9e-14 and x*t = 0 -> padded pixels add ~0


def _bce_cost_kernel(pred_ref, gt_ref, cost_ref, *, inv_p):
    """One (image b, C-chunk c, P-tile k) grid step.

    pred_ref: [1, tc, tP]     logits (bf16 or f32)
    gt_ref:   [1, Npad, tP]   binary targets, int8 (zero rows beyond N_i)
    cost_ref: [1, tc, Npad]   f32 accumulator, resident across the k (P) axis
    """
    k = pl.program_id(2)

    @pl.when(k == 0)
    def _init():
        cost_ref[...] = jnp.zeros_like(cost_ref)

    x_in = pred_ref[0]                                   # [tc, tP]
    x = x_in.astype(jnp.float32)

    # Target-independent part of the stable BCE-with-logits decomposition.
    # Kept in f32 (v5e has no bf16 EUP/VPU path).
    a = jnp.maximum(x, 0.0) + jnp.log1p(jnp.exp(-jnp.abs(x)))        # [tc, tP]
    a_sum = jnp.sum(a, axis=-1, keepdims=True)                       # [tc, 1]

    # Target-dependent part: bf16 x bf16 MXU contraction over the lane (P)
    # axis with f32 accumulation.  GT in {0,1} is exact in bf16.
    x_bf = x_in.astype(jnp.bfloat16)
    t_bf = gt_ref[0].astype(jnp.bfloat16)                            # [Npad, tP]
    xt = jax.lax.dot_general(x_bf, t_bf, (((1,), (1,)), ((), ())),
                             preferred_element_type=jnp.float32)      # [tc, Npad]

    cost_ref[...] += (a_sum - xt)[None, :, :]

    @pl.when(k == pl.num_programs(2) - 1)
    def _finalize():
        cost_ref[...] *= inv_p


def _round_up(x, m):
    return ((x + m - 1) // m) * m


def _sublane_rows(rows, itemsize):
    """Rows after padding to the native sublane tile (8 for f32, 16 bf16, 32 i8)."""
    return _round_up(rows, 8 * (4 // itemsize))


def _vmem_capacity_bytes():
    try:
        return int(pltpu.get_tpu_info().vmem_capacity_bytes)
    except Exception:
        return 128 << 20   # v5e/v6e physical VMEM


def _choose_tiles(P, C, n_pad, pred_itemsize, gt_itemsize):
    """Pick (tc, tp, p_pad, vmem_limit).

    tp is the largest 128-multiple P tile whose double-buffered pred+GT tiles
    fit a generation-aware budget (~32 MiB on 128 MiB-VMEM chips, ~16 MiB on
    v7x's 64 MiB); tc optionally splits C so the v7x megacore has a parallel
    axis even for B == 1 (no-op on single-TC v5e/v6e).
    """
    vmem_cap = _vmem_capacity_bytes()
    budget = int(min(vmem_cap // 4, 32 << 20))

    tc = C // 2 if (C % 16 == 0) else C   # keeps tc a multiple of 8 (or == C)

    pred_rows = _sublane_rows(tc, pred_itemsize)
    gt_rows = _sublane_rows(n_pad, gt_itemsize)
    bytes_per_lane = 2 * (pred_rows * pred_itemsize + gt_rows * gt_itemsize)  # x2 buffers
    max_tp = max(128, (budget // bytes_per_lane) // 128 * 128)

    p128 = _round_up(P, 128)
    if p128 <= max_tp:
        tp = p128
    else:
        n_tiles = -(-p128 // max_tp)                    # cdiv
        tp = _round_up(-(-p128 // n_tiles), 128)        # minimize pad waste
    p_pad = _round_up(P, tp)

    in_bytes = bytes_per_lane * tp
    out_bytes = 2 * _round_up(tc, 8) * _round_up(n_pad, 128) * 4
    vmem_limit = int(min(max(2 * (in_bytes + out_bytes), 32 << 20),
                         vmem_cap - (16 << 20)))        # keep headroom on v7x (64 MiB)
    return tc, tp, p_pad, vmem_limit


@partial(jax.jit, static_argnames=("tile_c", "tile_p", "compute_dtype", "vmem_limit"))
def _bce_cost_batched(pred, gt, *, tile_c, tile_p, compute_dtype, vmem_limit):
    """pred: [B,C,H,W] logits; gt: [B,Npad,Ppad] int8 -> cost [B,C,Npad] f32."""
    B, C, H, W = pred.shape
    p_true = H * W
    n_pad, p_pad = gt.shape[1], gt.shape[2]
    tc, tp = tile_c, tile_p

    x = pred.reshape(B, C, p_true).astype(compute_dtype)
    if p_pad > p_true:
        # Pad pixels with a large-negative logit: softplus ~ 0, x*t = 0.
        x = jnp.pad(x, ((0, 0), (0, 0), (0, p_pad - p_true)),
                    constant_values=_PAD_LOGIT)

    grid = (B, C // tc, p_pad // tp)
    kernel = partial(_bce_cost_kernel, inv_p=1.0 / p_true)
    return pl.pallas_call(
        kernel,
        out_shape=jax.ShapeDtypeStruct((B, C, n_pad), jnp.float32),
        grid_spec=pltpu.PrefetchScalarGridSpec(
            num_scalar_prefetch=0,
            grid=grid,
            in_specs=[
                pl.BlockSpec((1, tc, tp), lambda b, c, k: (b, c, k)),
                pl.BlockSpec((1, n_pad, tp), lambda b, c, k: (b, 0, k)),
            ],
            out_specs=pl.BlockSpec((1, tc, n_pad), lambda b, c, k: (b, c, 0)),
        ),
        compiler_params=pltpu.CompilerParams(
            dimension_semantics=("parallel", "parallel", "arbitrary"),
            vmem_limit_bytes=vmem_limit,
        ),
    )(x, gt)


def _min_cost_matching(cost):
    """Minimum-cost one-to-one matching (== scipy.linear_sum_assignment)."""
    # TODO(synk): Hungarian assignment is a host-side combinatorial step (no Pallas equivalent).
    try:
        from scipy.optimize import linear_sum_assignment
        r, c = linear_sum_assignment(cost)
        return np.asarray(r), np.asarray(c)
    except Exception:
        pass
    C, N = cost.shape
    best = None
    if C <= N:
        rows = list(range(C))
        for cols in itertools.permutations(range(N), C):
            s = cost[rows, list(cols)].sum()
            if best is None or s < best[0]:
                best = (s, rows, list(cols))
    else:
        cols = list(range(N))
        for rows in itertools.permutations(range(C), N):
            s = cost[list(rows), cols].sum()
            if best is None or s < best[0]:
                best = (s, list(rows), cols)
    return np.array(best[1], dtype=np.int64), np.array(best[2], dtype=np.int64)


def instance_loss_forward(pred_masks, gt_masks, *, compute_dtype=jnp.bfloat16):
    """pred_masks: [B,C,H,W] logits; gt_masks: list of [N_i,H,W] binary arrays.

    compute_dtype=jnp.bfloat16 (default) halves pred HBM traffic; GT ships as
    int8.  The kernel does transcendentals in f32 and accumulates in f32, so
    only the bf16 rounding of the logits differs from the f32 reference.
    """
    assert pred_masks.ndim == 4, 'pred_masks must be [B,C,H,W]'
    assert isinstance(gt_masks, (list, tuple)), 'gt_masks must be a list of arrays'
    B, C, H, W = pred_masks.shape
    assert len(gt_masks) == B, 'len(gt_masks) must equal batch size'
    P = H * W

    ns = []
    for g in gt_masks:
        assert g.ndim == 3, 'Each element in gt_masks must be [N,H,W]'
        ns.append(int(g.shape[0]))
    n_max = max(ns) if ns else 0
    # Fixed bucket, multiple of 32 (int8 native sublane tile) -> no recompiles
    # for varying instance counts and no sub-native int8 layouts.
    n_pad = max(32, _round_up(max(n_max, 1), 32))

    pred_itemsize = np.dtype(compute_dtype).itemsize
    tc, tp, p_pad, vmem_limit = _choose_tiles(P, C, n_pad, pred_itemsize, 1)

    # Pack GT once on the host: lane-dense int8 rows, zero-padded (rows & pixels).
    gt_np = np.zeros((B, n_pad, p_pad), dtype=np.int8)
    for b, g in enumerate(gt_masks):
        n = ns[b]
        if n:
            gt_np[b, :n, :P] = np.asarray(g, dtype=np.float32).reshape(n, P).astype(np.int8)

    cost = _bce_cost_batched(jnp.asarray(pred_masks), jnp.asarray(gt_np),
                             tile_c=tc, tile_p=tp,
                             compute_dtype=compute_dtype, vmem_limit=vmem_limit)
    cost_np = np.asarray(jax.block_until_ready(cost))   # single device->host transfer

    total_loss = 0.0
    valid_imgs = 0
    for b in range(B):
        n = ns[b]
        if n == 0:
            # Zero-padded GT column == BCE against the all-zero background target.
            total_loss += float(cost_np[b, :, 0].mean())
            valid_imgs += 1
            continue
        sub = cost_np[b, :, :n]
        r, c = _min_cost_matching(sub)
        if r.size > 0:
            total_loss += float(sub[r, c].mean())
            valid_imgs += 1
    return total_loss / max(valid_imgs, 1)


def _reference_loss_numpy(pred_masks, gt_masks):
    """Pure numpy f64 reference of the PyTorch module's forward."""
    pred = np.asarray(pred_masks, dtype=np.float64)
    B, C, H, W = pred.shape
    P = H * W
    total, valid = 0.0, 0
    for b in range(B):
        x = pred[b].reshape(C, P)
        a = np.maximum(x, 0.0) + np.log1p(np.exp(-np.abs(x)))
        g = np.asarray(gt_masks[b], dtype=np.float64)
        n = g.shape[0]
        if n == 0:
            total += a.mean()
            valid += 1
            continue
        t = g.reshape(n, P)
        cost = a.mean(axis=1, keepdims=True) - (x @ t.T) / P
        r, c = _min_cost_matching(cost)
        total += cost[r, c].mean()
        valid += 1
    return total / max(valid, 1)


if __name__ == "__main__":
    key = jax.random.PRNGKey(0)
    B, C, H, W = 2, 4, 16, 16
    k1, k2 = jax.random.split(key, 2)

    pred_masks = jax.random.normal(k1, (B, C, H, W), dtype=jnp.float32)
    # image 0: 3 GT instances, image 1: 0 GT instances (background branch)
    gt0 = (jax.random.uniform(k2, (3, H, W)) > 0.5).astype(jnp.float32)
    gt1 = jnp.zeros((0, H, W), dtype=jnp.float32)
    gt_masks = [gt0, gt1]

    loss = instance_loss_forward(pred_masks, gt_masks)
    jax.block_until_ready(jnp.asarray(loss))

    ref = _reference_loss_numpy(pred_masks, gt_masks)
    assert abs(float(loss) - float(ref)) < 2e-2, (loss, ref)
    print("KERNEL_OK")
</pallas_src>

<mosaic_0001>
module attributes {stable_mosaic.version = 11 : i64} {
  func.func @_bce_cost_kernel(%arg0: i32, %arg1: i32, %arg2: i32, %arg3: memref<1x4x256xbf16, #tpu.memory_space<vmem>>, %arg4: memref<1x32x256xi8, #tpu.memory_space<vmem>>, %arg5: memref<1x4x32xf32, #tpu.memory_space<vmem>>) attributes {dimension_semantics = [#tpu.dimension_semantics<parallel>, #tpu.dimension_semantics<parallel>, #tpu.dimension_semantics<arbitrary>], iteration_bounds = array<i64: 2, 1, 1>, scalar_prefetch = 0 : i64, scratch_operands = 0 : i64, tpu.core_type = #tpu.core_type<tc>, window_params = [{transform_indices = @transform_0, window_bounds = array<i64: 1, 4, 256>}, {transform_indices = @transform_1, window_bounds = array<i64: 1, 32, 256>}, {transform_indices = @transform_2, window_bounds = array<i64: 1, 4, 32>}]} {
    %c0_i32 = arith.constant 0 : i32
    %0 = arith.cmpi eq, %arg2, %c0_i32 : i32
    %1 = arith.extui %0 : i1 to i32
    %c0_i32_0 = arith.constant 0 : i32
    %2 = arith.cmpi ne, %1, %c0_i32_0 : i32
    scf.if %2 {
      %cst_17 = arith.constant 0.000000e+00 : f32
      %29 = vector.broadcast %cst_17 : f32 to vector<1x4x32xf32>
      %c0_18 = arith.constant 0 : index
      %c0_19 = arith.constant 0 : index
      %c0_20 = arith.constant 0 : index
      %30 = vector.load %arg5[%c0_18, %c0_19, %c0_20] : memref<1x4x32xf32, #tpu.memory_space<vmem>>, vector<1x4x32xf32>
      tpu.vector_store %arg5[%c0_18, %c0_19, %c0_20], %29 {strides = array<i32>} : memref<1x4x32xf32, #tpu.memory_space<vmem>>, vector<1x4x32xf32>,
    } else {
    }
    %c0 = arith.constant 0 : index
    %c0_1 = arith.constant 0 : index
    %c0_2 = arith.constant 0 : index
    %3 = vector.load %arg3[%c0, %c0_1, %c0_2] : memref<1x4x256xbf16, #tpu.memory_space<vmem>>, vector<1x4x256xbf16>
    %4 = vector.shape_cast %3 : vector<1x4x256xbf16> to vector<4x256xbf16>
    %5 = arith.extf %4 : vector<4x256xbf16> to vector<4x256xf32>
    %cst = arith.constant 0.000000e+00 : f32
    %6 = vector.broadcast %cst : f32 to vector<4x256xf32>
    %7 = arith.maximumf %5, %6 : vector<4x256xf32>
    %8 = math.absf %5 : vector<4x256xf32>
    %cst_3 = arith.constant 0.000000e+00 : f32
    %9 = vector.broadcast %cst_3 : f32 to vector<4x256xf32>
    %10 = arith.subf %9, %8 : vector<4x256xf32>
    %11 = math.exp %10 : vector<4x256xf32>
    %12 = math.log1p %11 : vector<4x256xf32>
    %13 = arith.addf %7, %12 : vector<4x256xf32>
    %cst_4 = arith.constant dense<0.000000e+00> : vector<4xf32>
    %14 = vector.multi_reduction <add>, %13, %cst_4 [1] : vector<4x256xf32> to vector<4xf32>
    %15 = vector.shape_cast %14 : vector<4xf32> to vector<4x1xf32>
    %c0_5 = arith.constant 0 : index
    %c0_6 = arith.constant 0 : index
    %c0_7 = arith.constant 0 : index
    %16 = vector.load %arg4[%c0_5, %c0_6, %c0_7] : memref<1x32x256xi8, #tpu.memory_space<vmem>>, vector<1x32x256xi8>
    %17 = vector.shape_cast %16 : vector<1x32x256xi8> to vector<32x256xi8>
    %18 = arith.sitofp %17 : vector<32x256xi8> to vector<32x256xbf16>
    %cst_8 = arith.constant dense<0.000000e+00> : vector<4x32xf32>
    %19 = tpu.matmul %4, %18, %cst_8 {dimension_numbers = #tpu.dot_dimension_numbers<[1], [1], [0], [0], [0, 0, 1, 0], [], []>} : vector<4x256xbf16>, vector<32x256xbf16>, vector<4x32xf32> -> vector<4x32xf32>
    %c0_9 = arith.constant 0 : index
    %c0_10 = arith.constant 0 : index
    %c0_11 = arith.constant 0 : index
    %20 = vector.load %arg5[%c0_9, %c0_10, %c0_11] : memref<1x4x32xf32, #tpu.memory_space<vmem>>, vector<1x4x32xf32>
    %21 = vector.broadcast %15 : vector<4x1xf32> to vector<4x32xf32>
    %22 = arith.subf %21, %19 : vector<4x32xf32>
    %23 = vector.shape_cast %22 : vector<4x32xf32> to vector<1x4x32xf32>
    %24 = arith.addf %20, %23 : vector<1x4x32xf32>
    %c0_12 = arith.constant 0 : index
    %c0_13 = arith.constant 0 : index
    %c0_14 = arith.constant 0 : index
    %25 = vector.load %arg5[%c0_12, %c0_13, %c0_14] : memref<1x4x32xf32, #tpu.memory_space<vmem>>, vector<1x4x32xf32>
    tpu.vector_store %arg5[%c0_12, %c0_13, %c0_14], %24 {strides = array<i32>} : memref<1x4x32xf32, #tpu.memory_space<vmem>>, vector<1x4x32xf32>,
    %c0_i32_15 = arith.constant 0 : i32
    %26 = arith.cmpi eq, %arg2, %c0_i32_15 : i32
    %27 = arith.extui %26 : i1 to i32
    %c0_i32_16 = arith.constant 0 : i32
    %28 = arith.cmpi ne, %27, %c0_i32_16 : i32
    scf.if %28 {
      %c0_17 = arith.constant 0 : index
      %c0_18 = arith.constant 0 : index
      %c0_19 = arith.constant 0 : index
      %29 = vector.load %arg5[%c0_17, %c0_18, %c0_19] : memref<1x4x32xf32, #tpu.memory_space<vmem>>, vector<1x4x32xf32>
      %cst_20 = arith.constant 3.906250e-03 : f32
      %30 = vector.broadcast %cst_20 : f32 to vector<1x4x32xf32>
      %31 = arith.mulf %29, %30 : vector<1x4x32xf32>
      %c0_21 = arith.constant 0 : index
      %c0_22 = arith.constant 0 : index
      %c0_23 = arith.constant 0 : index
      %32 = vector.load %arg5[%c0_21, %c0_22, %c0_23] : memref<1x4x32xf32, #tpu.memory_space<vmem>>, vector<1x4x32xf32>
      tpu.vector_store %arg5[%c0_21, %c0_22, %c0_23], %31 {strides = array<i32>} : memref<1x4x32xf32, #tpu.memory_space<vmem>>, vector<1x4x32xf32>,
    } else {
    }
    return
  }
  func.func @transform_0(%arg0: i32, %arg1: i32, %arg2: i32) -> (i32, i32, i32) {
    %c0_i32 = arith.constant 0 : i32
    return %arg0, %arg1, %arg2 : i32, i32, i32
  }
  func.func @transform_1(%arg0: i32, %arg1: i32, %arg2: i32) -> (i32, i32, i32) {
    %c0_i32 = arith.constant 0 : i32
    %c0_i32_0 = arith.constant 0 : i32
    return %arg0, %c0_i32, %arg2 : i32, i32, i32
  }
  func.func @transform_2(%arg0: i32, %arg1: i32, %arg2: i32) -> (i32, i32, i32) {
    %c0_i32 = arith.constant 0 : i32
    %c0_i32_0 = arith.constant 0 : i32
    return %arg0, %arg1, %c0_i32 : i32, i32, i32
  }
}

</mosaic_0001>

<llo_original>
// kernel: _bce_cost_batched.1
$region0: #{_bce_cost_batched.1}
  #allocation0 [shape = 'u32[]', space=smem, size = 0x4, offset = 0x4, fixed_abs, tag = 'smem constant byte address 0x4 - core index']
  #allocation1 [shape = 'u32[72,128]{1,0:T(1,128)}', space=vmem, size = 0x9000, scoped, tag = 'internal scratch']
  %s0 = inlined_call_operand.vmem [shape: bf16[2,4,256], index: 0, kind: input, shape index: {}]
  %s1 = inlined_call_operand.vmem [shape: s8[2,32,256], index: 1, kind: input, shape index: {}]
  %s2 = inlined_call_operand.hbm [shape: f32[2,4,32], index: 2, kind: output, shape index: {}]
  %s3 = sld [smem:[#allocation0]]
  $region49: #{_bce_cost_batched.1} parent=0
    _
  %s5 = ssub.s32 1, %s3
  %s6 = scalar_select 0, %s5, %s3
  $region1: #{_bce_cost_batched.1} parent=0
    #allocation2 [shape = 'u8[4096]{0}', space=vmem, size = 0x1000, scoped, tag = 'output window, operand 0']
    #allocation3 [shape = 's32[2]{0}', space=sflag, size = 0x8, scoped, tag = 'scoped memory for _bce_cost_batched.1']
    %7 = vsyncpa [#allocation3], 0
    %s8 = scalar_lea.sflag [#allocation3], 1
    %9 = vsyncpa %s8, 0
    loop: start=0, step=1, limit=4
    $region2: #{_bce_cost_batched.1} parent=1 // loop_pre_header
      _
    $region3: #{_bce_cost_batched.1} parent=1 // loop_header
      %s11 = sphi 0, %s15
      %p12 = scmp.ge.s32.totalorder %s11, 4
      %s18 = sphi 0, %s37
      %s19 = sphi 0, %s33
      %s20 = sphi 0, %s29
      %s21 = sphi 0, %s18
      %s22 = sphi 0, %s19
      %s23 = sphi 0, %s20
      %s24 = sphi 0, %s21
      %s25 = sphi 0, %s22
      %s26 = sphi 0, %s23
      %s44 = sphi 0, %s46
      %s47 = sphi 0, %s44
      %s48 = sphi 0, %s47
      %s64 = sphi 0, %s48
      %s72 = sphi 0, %s74
      %s75 = sphi 0, %s72
      %s76 = sphi 0, %s75
      %s92 = sphi 0, %s76
      %s100 = sphi 0, %s102
      %s103 = sphi 0, %s100
      %s104 = sphi 0, %s103
      %s120 = sphi 0, %s104
    $region4: #{_bce_cost_batched.1} parent=1 // loop_header_branch
      %14 = sbr.rel (%p12) target = $region8
    $region5: #{_bce_cost_batched.1} parent=1 // loop_body
      %s16 = ssub.s32 %s11, 1
      %s17 = ssub.s32 %s11, 2
      %s27 = sadd.s32 1, %s20
      %p28 = scmp.ge.s32.totalorder %s27, 1
      %s29 = scalar_select %p28, 0, %s27
      %s30 = sadd.s32 1, %s19
      %s31 = scalar_select %p28, %s30, %s19
      %p32 = scmp.ge.s32.totalorder %s31, 1
      %s33 = scalar_select %p32, 0, %s31
      %s34 = sadd.s32 1, %s18
      %s35 = scalar_select %p32, %s34, %s18
      %p36 = scmp.ge.s32.totalorder %s35, 2
      %s37 = scalar_select %p36, 0, %s35
      %s38 = ssub.s32 %s18, %s37
      %s39 = ssub.s32 %s19, %s33
      %s40 = sor.u32 %s38, %s39
      %s41 = ssub.s32 %s20, %s29
      %s42 = sor.u32 %s40, %s41
      %p43 = scmp.eq.s32.totalorder %s42, 0
      %s45 = sadd.s32 %s44, 1
      %s46 = scalar_select %p43, %s44, %s45
      %p49 = pneg %p43
      %p50 = scmp.eq.s32.totalorder %s11, 1
      %p51 = por %p49, %p50
      %p52 = scmp.ne.s32.totalorder %s44, %s47
      %p53 = scmp.eq.s32.totalorder %s11, 0
      %p54 = por %p52, %p53
      %p55 = scmp.ne.s32.totalorder %s44, %s47
      %p56 = scmp.eq.s32.totalorder %s16, 1
      %p57 = por %p55, %p56
      %p58 = scmp.ne.s32.totalorder %s47, %s48
      %p59 = scmp.eq.s32.totalorder %s16, 0
      %p60 = por %p58, %p59
      %p61 = scmp.ne.s32.totalorder %s47, %s48
      %p62 = scmp.eq.s32.totalorder %s17, 1
      %p63 = por %p61, %p62
      %p65 = scmp.ne.s32.totalorder %s48, %s64
      %p66 = scmp.eq.s32.totalorder %s17, 0
      %p67 = por %p65, %p66
      %s68 = ssub.s32 %s18, %s37
      %s69 = ssub.s32 %s20, %s29
      %s70 = sor.u32 %s68, %s69
      %p71 = scmp.eq.s32.totalorder %s70, 0
      %s73 = sadd.s32 %s72, 1
      %s74 = scalar_select %p71, %s72, %s73
      %p77 = pneg %p71
      %p78 = scmp.eq.s32.totalorder %s11, 1
      %p79 = por %p77, %p78
      %p80 = scmp.ne.s32.totalorder %s72, %s75
      %p81 = scmp.eq.s32.totalorder %s11, 0
      %p82 = por %p80, %p81
      %p83 = scmp.ne.s32.totalorder %s72, %s75
      %p84 = scmp.eq.s32.totalorder %s16, 1
      %p85 = por %p83, %p84
      %p86 = scmp.ne.s32.totalorder %s75, %s76
      %p87 = scmp.eq.s32.totalorder %s16, 0
      %p88 = por %p86, %p87
      %p89 = scmp.ne.s32.totalorder %s75, %s76
      %p90 = scmp.eq.s32.totalorder %s17, 1
      %p91 = por %p89, %p90
      %p93 = scmp.ne.s32.totalorder %s76, %s92
      %p94 = scmp.eq.s32.totalorder %s17, 0
      %p95 = por %p93, %p94
      %s96 = ssub.s32 %s18, %s37
      %s97 = ssub.s32 %s19, %s33
      %s98 = sor.u32 %s96, %s97
      %p99 = scmp.eq.s32.totalorder %s98, 0
      %s101 = sadd.s32 %s100, 1
      %s102 = scalar_select %p99, %s100, %s101
      %p105 = pneg %p99
      %p106 = scmp.eq.s32.totalorder %s11, 1
      %p107 = por %p105, %p106
      %p108 = scmp.ne.s32.totalorder %s100, %s103
      %p109 = scmp.eq.s32.totalorder %s11, 0
      %p110 = por %p108, %p109
      %p111 = scmp.ne.s32.totalorder %s100, %s103
      %p112 = scmp.eq.s32.totalorder %s16, 1
      %p113 = por %p111, %p112
      %p114 = scmp.ne.s32.totalorder %s103, %s104
      %p115 = scmp.eq.s32.totalorder %s16, 0
      %p116 = por %p114, %p115
      %p117 = scmp.ne.s32.totalorder %s103, %s104
      %p118 = scmp.eq.s32.totalorder %s17, 1
      %p119 = por %p117, %p118
      %p121 = scmp.ne.s32.totalorder %s104, %s120
      %p122 = scmp.eq.s32.totalorder %s17, 0
      %p123 = por %p121, %p122
      %p124 = scmp.le.s32.totalorder 1, %s11
      %p125 = scmp.lt.s32.totalorder %s11, 3
      %p126 = pnand %p124, %p125
      %p127 = pneg %p126
      // Predicated region
      $region9: #{_bce_cost_batched.1} parent=5 // pred_check
        _
      $region10: #{_bce_cost_batched.1} parent=5 // pred_check_branch
        %129 = sbr.rel (%p126) target = $region12
      $region11: #{_bce_cost_batched.1} parent=5 // pred_region
        %s130 = ssub.s32 %s11, 1
      $region12: #{_bce_cost_batched.1} parent=5 // pred_fallthru
        _
      %p131 = scmp.lt.s32.totalorder %s11, 2
      // Predicated region
      $region13: #{_bce_cost_batched.1} parent=5 // pred_check
        %p132 = pneg %p131
      $region14: #{_bce_cost_batched.1} parent=5 // pred_check_branch
        %134 = sbr.rel (%p132) target = $region16
      $region15: #{_bce_cost_batched.1} parent=5 // pred_region
        // Predicated region
        $region17: #{_bce_cost_batched.1} parent=15 // pred_check
          %p135 = pneg %p54
        $region18: #{_bce_cost_batched.1} parent=15 // pred_check_branch
          %137 = sbr.rel (%p135) target = $region20
        $region19: #{_bce_cost_batched.1} parent=15 // pred_region
          %s138 = smul.u32 2, %s20
          %p139 = scmp.lt.s32.totalorder %s18, 1
          %s140 = scalar_select %p139, %s18, 1
          %p141 = scmp.lt.s32.totalorder %s19, 0
          %s142 = scalar_select %p141, %s19, 0
          %p143 = scmp.lt.s32.totalorder %s138, 1
          %s144 = scalar_select %p143, %s138, 1
          %s145 = smul.addr %s142, 2
          %s146 = sadd.s32 %s144, %s145
          %s147 = smul.addr %s140, 2
          %s148 = sadd.s32 %s146, %s147
          %s149 = smul.addr %s148, 2
          %s150 = scalar_lea.vmem %s0, %s149
          %s151 = smul.u32 2, %s20
        $region20: #{_bce_cost_batched.1} parent=15 // pred_fallthru
          _
        // Predicated region
        $region21: #{_bce_cost_batched.1} parent=15 // pred_check
          %p152 = pneg %p82
        $region22: #{_bce_cost_batched.1} parent=15 // pred_check_branch
          %154 = sbr.rel (%p152) target = $region24
        $region23: #{_bce_cost_batched.1} parent=15 // pred_region
          %s155 = smul.u32 2, %s20
          %p156 = scmp.lt.s32.totalorder %s18, 1
          %s157 = scalar_select %p156, %s18, 1
          %p158 = scmp.lt.s32.totalorder %s155, 1
          %s159 = scalar_select %p158, %s155, 1
          %s160 = smul.addr %s157, 2
          %s161 = sadd.s32 %s159, %s160
          %s162 = smul.addr %s161, 8
          %s163 = scalar_lea.vmem %s1, %s162
          %s164 = smul.u32 2, %s20
        $region24: #{_bce_cost_batched.1} parent=15 // pred_fallthru
          _
      $region16: #{_bce_cost_batched.1} parent=5 // pred_fallthru
        _
      %p165 = scmp.le.s32.totalorder 1, %s11
      %p166 = scmp.lt.s32.totalorder %s11, 3
      %p167 = pnand %p165, %p166
      %p168 = pneg %p167
      // Predicated region
      $region25: #{_bce_cost_batched.1} parent=5 // pred_check
        _
      $region26: #{_bce_cost_batched.1} parent=5 // pred_check_branch
        %170 = sbr.rel (%p167) target = $region28
      $region27: #{_bce_cost_batched.1} parent=5 // pred_region
        %s171 = ssub.s32 %s11, 1
        %s172 = smul.u32 2, %s23
        %p173 = scmp.lt.s32.totalorder %s21, 1
        %s174 = scalar_select %p173, %s21, 1
        %p175 = scmp.lt.s32.totalorder %s22, 0
        %s176 = scalar_select %p175, %s22, 0
        %p177 = scmp.lt.s32.totalorder %s172, 1
        %s178 = scalar_select %p177, %s172, 1
        %s179 = smul.addr %s176, 2
        %s180 = sadd.s32 %s178, %s179
        %s181 = smul.addr %s174, 2
        %s182 = sadd.s32 %s180, %s181
        %s183 = smul.addr %s182, 2
        %s184 = scalar_lea.vmem %s0, %s183
        %p185 = pneg %p60
        %p186 = pneg %p57
        %s187 = smul.u32 2, %s23
        %p188 = scmp.lt.s32.totalorder %s21, 1
        %s189 = scalar_select %p188, %s21, 1
        %p190 = scmp.lt.s32.totalorder %s187, 1
        %s191 = scalar_select %p190, %s187, 1
        %s192 = smul.addr %s189, 2
        %s193 = sadd.s32 %s191, %s192
        %s194 = smul.addr %s193, 8
        %s195 = scalar_lea.vmem %s1, %s194
        %p196 = pneg %p88
        %p197 = pneg %p85
        %p198 = pneg %p116
        %p199 = pneg %p113
        %s200 = sand.u32 %s103, 1
        %s201 = scalar_lea.sflag [#allocation3], %s200
        %s202 = sand.u32 %s103, 1
        %s203 = smul.addr %s202, 4
        %s204 = scalar_lea.vmem [#allocation2], %s203
        %s205 = smul.u32 2, %s23
        %p206 = scmp.lt.s32.totalorder %s21, 1
        %s207 = scalar_select %p206, %s21, 1
        %p208 = scmp.lt.s32.totalorder %s22, 0
        %s209 = scalar_select %p208, %s22, 0
        %p210 = scmp.lt.s32.totalorder %s205, 1
        %s211 = scalar_select %p210, %s205, 1
        %s212 = smul.addr %s209, 2
        %s213 = sadd.s32 %s211, %s212
        %s214 = smul.addr %s207, 2
        %s215 = sadd.s32 %s213, %s214
        %s216 = smul.addr %s215, 2
        %s217 = scalar_lea.vmem %s0, %s216
        %s218 = smul.u32 2, %s23
        %s219 = smul.u32 2, %s23
        %p220 = scmp.lt.s32.totalorder %s21, 1
        %s221 = scalar_select %p220, %s21, 1
        %p222 = scmp.lt.s32.totalorder %s219, 1
        %s223 = scalar_select %p222, %s219, 1
        %s224 = smul.addr %s221, 2
        %s225 = sadd.s32 %s223, %s224
        %s226 = smul.addr %s225, 8
        %s227 = scalar_lea.vmem %s1, %s226
        %s228 = smul.u32 2, %s23
        %p230 = scmp.eq.s32.totalorder %s23, 0
        // Predicated region
        $region29: #{_bce_cost_batched.1} parent=27 // pred_check
          %p231 = pneg %p230
        $region30: #{_bce_cost_batched.1} parent=27 // pred_check_branch
          %233 = sbr.rel (%p231) target = $region32
        $region31: #{_bce_cost_batched.1} parent=27 // pred_region
          %vm234 = vcmask 257024
          %235 = vst.msk [vmem:[%s204] sm:$0xf] %vm234, 0.0
        $region32: #{_bce_cost_batched.1} parent=27 // pred_fallthru
          _
        %v236 = vld [vmem:[%s217] sm:$0xf]
        %v237 = vunpack.c.l.bf16 %v236
        %v238 = vmax.f32 %v237, 0.0
        %v239 = vand.u32 2147483647, %v237
        %v240 = vsub.f32 0.0, %v239
        %v241 = vmul.f32 %v240, 1.442695
        %v242 = vpow.pop %v241
        %v243 = vadd.f32 %v242, 1.0
        %v244 = vlog2.pop %v243
        %v245 = vmul.f32 %v244, 0.6931472
        %v246 = vmul.f32 -0.5, %v242
        %v247 = vadd.f32 %v246, 1.0
        %v248 = vmul.f32 %v247, %v242
        %v249 = vand.u32 2147483647, %v242
        %vm250 = vcmp.lt.f32.partialorder %v249, 0.0004427343
        %v251 = vsel %vm250, %v248, %v245
        %v252 = vadd.f32 %v238, %v251
        %254 = vst [vmem:[#allocation1] ss:$2 sm:$0xff] %v252
        %v255 = vld.sshfl [vmem:[#allocation1] sm:$0xff pattern:$0x75316420]
        %v256 = vld.sshfl [vmem:[#allocation1 + $0x8] sm:$0xff pattern:$0x75316420]
        %vm259 = vcmask 1043456
        %v260 = vsel %vm259, %v255, 0.0
        %v261 = vsel %vm259, %v256, 0.0
        %v262 = vadd.f32 %v260, %v261
        %263 = vadd.xlane.f32.xlu0 %v262
        %v264 = vpop.xlane.xlu0 %263
        %v265 = vld [vmem:[%s227] sm:$0xff]
        %v266 = vld [vmem:[%s227 + $0x8] sm:$0xff]
        %v267 = vunpack.c.0.s8 %v265
        %v268 = vunpack.c.0.s8 %v266
        %v269 = vunpack.c.1.s8 %v265
        %v270 = vunpack.c.1.s8 %v266
        %v271 = vunpack.c.2.s8 %v265
        %v272 = vunpack.c.2.s8 %v266
        %v273 = vunpack.c.3.s8 %v265
        %v274 = vunpack.c.3.s8 %v266
        %v275 = vcvt.s32.f32 %v267
        %v276 = vcvt.s32.f32 %v268
        %v277 = vcvt.s32.f32 %v269
        %v278 = vcvt.s32.f32 %v270
        %v279 = vcvt.s32.f32 %v271
        %v280 = vcvt.s32.f32 %v272
        %v281 = vcvt.s32.f32 %v273
        %v282 = vcvt.s32.f32 %v274
        %v283 = vpack.c.bf16 %v277, %v275
        %v284 = vpack.c.bf16 %v278, %v276
        %v285 = vpack.c.bf16 %v281, %v279
        %v286 = vpack.c.bf16 %v282, %v280
        %288 = vst [vmem:[#allocation1] ss:$4 sm:$0xff] %v236
        %v289 = vld.sshfl [vmem:[#allocation1] sm:$0xff pattern:$0x73625140]
        %v290 = vld.sshfl [vmem:[#allocation1 + $0x8] sm:$0xff pattern:$0x73625140]
        %293 = vmatpush.bf16.xpose.msra.mxu0 0
        %294 = vmatpush.bf16.xpose.msra.mxu0 0
        %295 = vmatpush.bf16.xpose.msra.mxu0 0
        %296 = vmatpush.bf16.xpose.msra.mxu0 0
        %297 = vmatpush.bf16.xpose.msra.mxu0 0
        %298 = vmatpush.bf16.xpose.msra.mxu0 0
        %299 = vmatpush.bf16.xpose.msra.mxu0 %v285
        %300 = vmatpush.bf16.xpose.msra.mxu0 %v283
        %301 = vmatmul.bf16.gmra.mxu0 %v289
        %v302 = vpop.f32.mrf.mxu0
        %v303 = vadd.f32 0.0, %v302
        %v304 = vpop.f32.mrf.mxu0
        %305 = vdwg.mxu0
        %306 = vmatpush.bf16.xpose.msra.mxu0 0
        %307 = vmatpush.bf16.xpose.msra.mxu0 0
        %308 = vmatpush.bf16.xpose.msra.mxu0 0
        %309 = vmatpush.bf16.xpose.msra.mxu0 0
        %310 = vmatpush.bf16.xpose.msra.mxu0 0
        %311 = vmatpush.bf16.xpose.msra.mxu0 0
        %312 = vmatpush.bf16.xpose.msra.mxu0 %v286
        %313 = vmatpush.bf16.xpose.msra.mxu0 %v284
        %314 = vmatmul.bf16.gmra.mxu0 %v290
        %v315 = vpop.f32.mrf.mxu0
        %v316 = vadd.f32 %v303, %v315
        %v317 = vpop.f32.mrf.mxu0
        %318 = vdwg.mxu0
        %v319 = vld [vmem:[%s204] sm:$0xf]
        %v320 = vsub.f32 %v264, %v316
        %v321 = vadd.f32 %v319, %v320
        %vm322 = vcmask 257024
        %323 = vst.msk [vmem:[%s204] sm:$0xf] %vm322, %v321
        // Predicated region
        $region33: #{_bce_cost_batched.1} parent=27 // pred_check
          %p324 = pneg %p230
        $region34: #{_bce_cost_batched.1} parent=27 // pred_check_branch
          %326 = sbr.rel (%p324) target = $region36
        $region35: #{_bce_cost_batched.1} parent=27 // pred_region
          %v327 = vld [vmem:[%s204] sm:$0xf]
          %v328 = vmul.f32 %v327, 0.00390625
          %329 = vst.msk [vmem:[%s204] sm:$0xf] %vm322, %v328
        $region36: #{_bce_cost_batched.1} parent=27 // pred_fallthru
          _
        %s330 = sand.u32 %s103, 1
        %s331 = scalar_lea.sflag [#allocation3], %s330
        %s332 = sand.u32 %s103, 1
        %s333 = smul.addr %s332, 4
        %s334 = scalar_lea.vmem [#allocation2], %s333
        // Predicated region
        $region37: #{_bce_cost_batched.1} parent=27 // pred_check
          %p335 = pneg %p113
        $region38: #{_bce_cost_batched.1} parent=27 // pred_check_branch
          %337 = sbr.rel (%p335) target = $region40
        $region39: #{_bce_cost_batched.1} parent=27 // pred_region
          %339 = vsyncadd %s331, 0
          %s340 = sadd.s32 %s22, %s21
          %s341 = smul.addr %s340, 4
          %s342 = scalar_lea.hbm %s2, %s341
          %s344 = sshll.u32 %s334, 4
          %s345 = int_to_ptr.vmem [resolvable:$true] %s344
          %s346 = sshll.u32 %s342, 4
          %s347 = int_to_ptr.hbm [resolvable:$true] %s346
          %349 = dma.vmem_to_hbm [thread:$0]  %s345, 64, %s347, %s331
        $region40: #{_bce_cost_batched.1} parent=27 // pred_fallthru
          _
      $region28: #{_bce_cost_batched.1} parent=5 // pred_fallthru
        _
      %p350 = scmp.le.s32.totalorder 2, %s11
      // Predicated region
      $region41: #{_bce_cost_batched.1} parent=5 // pred_check
        %p351 = pneg %p350
      $region42: #{_bce_cost_batched.1} parent=5 // pred_check_branch
        %353 = sbr.rel (%p351) target = $region44
      $region43: #{_bce_cost_batched.1} parent=5 // pred_region
        %s354 = ssub.s32 %s11, 2
        // Predicated region
        $region45: #{_bce_cost_batched.1} parent=43 // pred_check
          %p355 = pneg %p119
        $region46: #{_bce_cost_batched.1} parent=43 // pred_check_branch
          %357 = sbr.rel (%p355) target = $region48
        $region47: #{_bce_cost_batched.1} parent=43 // pred_region
          %s358 = sand.u32 %s104, 1
          %s359 = scalar_lea.sflag [#allocation3], %s358
          %s360 = sand.u32 %s104, 1
          %s361 = smul.addr %s360, 4
          %s362 = scalar_lea.vmem [#allocation2], %s361
          %364 = dma.done %s359, 64
        $region48: #{_bce_cost_batched.1} parent=43 // pred_fallthru
          _
      $region44: #{_bce_cost_batched.1} parent=5 // pred_fallthru
        _
    $region6: #{_bce_cost_batched.1} parent=1 // loop_footer
      %s15 = sadd.s32 1, %s11
    $region7: #{_bce_cost_batched.1} parent=1 // loop_footer_branch
      %10 = sbr.rel target = $region3
    $region8: #{_bce_cost_batched.1} parent=1 // loop_exit
      _
    %365 = vsyncpa [#allocation3], 1
    %s366 = scalar_lea.sflag [#allocation3], 1
    %367 = vsyncpa %s366, 1

</llo_original>
